<compile_context>
chip_gen: v5e
topology: v5e:2x2
jax: 0.10.0
libtpu: 0.0.40
codegen_flags: <defaults>
</compile_context>

<pallas_src>
import functools

import jax
import jax.numpy as jnp
from jax.experimental import pallas as pl
from jax.experimental.pallas import tpu as pltpu

IN_F = 8      # input features
H = 64        # padded hidden width (real hidden = 50; 64 keeps bf16 sublane tiling legal)
AUX_W = 16    # columns in the packed f32 aux slab


def mlp_kernel(x_ref, w2_ref, aux_ref, o_ref):
    # Resident packed params (constant index_maps -> DMA'd once, reused every grid step).
    w1 = aux_ref[:, 0:IN_F]                    # (H, 8)  F6 weight, torch (out, in), f32
    b1 = aux_ref[:, IN_F:IN_F + 1]             # (H, 1)
    b2 = aux_ref[:, IN_F + 1:IN_F + 2]         # (H, 1)
    w3 = aux_ref[:, IN_F + 2:IN_F + 3]         # (H, 1)  OUT weight as a column
    b3 = aux_ref[0:1, IN_F + 3:IN_F + 4]       # (1, 1)  OUT bias

    xt = x_ref[...]                            # (8, TB) f32, batch on the lane axis

    # ---- F6 (8 -> H) + ReLU on the VPU: 8 broadcast multiply-adds, no MXU push for K=8.
    h1 = w1[:, 0:1] * xt[0:1, :]               # (H, TB)
    for k in range(1, IN_F):
        h1 = h1 + w1[:, k:k + 1] * xt[k:k + 1, :]
    h1 = jnp.maximum(h1 + b1, 0.0)             # f32 epilogue (v5e-safe)

    # ---- F7 (H -> H) + ReLU on the MXU: bf16 operands by default, f32 accumulation.
    w2 = w2_ref[...]                           # (H, H) compute dtype
    h2 = jnp.dot(w2, h1.astype(w2.dtype), preferred_element_type=jnp.float32)
    h2 = jnp.maximum(h2 + b2, 0.0)

    # ---- OUT (H -> 1): VPU multiply + sublane (XLU) reduce; lane-dense (1, TB) output row.
    out = jnp.sum(h2 * w3, axis=0, keepdims=True) + b3
    o_ref[...] = out.astype(o_ref.dtype)


def _round_up(n, m):
    return (n + m - 1) // m * m


@functools.partial(jax.jit, static_argnames=("block_b",))
def on_classify_v1(x, packed_params, *, block_b=1024):
    """x: (B, 8) float32 -> (B, 1) float32. packed_params = pack_params(params)."""
    w2p, aux = packed_params
    B = x.shape[0]

    B_ceil = _round_up(max(B, 1), 128)
    TB = min(_round_up(block_b, 128), B_ceil)          # batch tile, multiple of 128
    # Guarantee >= 2 grid steps when possible: keeps the DMA pipeline multi-step and
    # lets the "parallel" batch axis shard across v7x's two TensorCores.
    if B_ceil > 128 and B_ceil // TB < 2:
        TB = _round_up((B_ceil + 1) // 2, 128)
    B_pad = _round_up(B_ceil, TB)

    # Lane-dense, pre-transposed activations (8, B_pad): batch lives on the lane axis,
    # so no in-kernel transpose/relayout is needed. Kept in f32 (layer 1 is VPU math).
    xt = jnp.pad(x.astype(jnp.float32).T, ((0, 0), (0, B_pad - B)))

    out = pl.pallas_call(
        mlp_kernel,
        out_shape=jax.ShapeDtypeStruct((1, B_pad), jnp.float32),
        grid=(B_pad // TB,),
        in_specs=[
            pl.BlockSpec((IN_F, TB), lambda i: (0, i)),   # lane-dense batch tile of x^T
            pl.BlockSpec((H, H), lambda i: (0, 0)),       # resident W2 (compute dtype)
            pl.BlockSpec((H, AUX_W), lambda i: (0, 0)),   # resident f32 W1/bias/w3 slab
        ],
        out_specs=pl.BlockSpec((1, TB), lambda i: (0, i)),  # lane-dense output row
        compiler_params=pltpu.CompilerParams(
            dimension_semantics=("parallel",),            # shard batch grid over TCs (v7x)
            vmem_limit_bytes=32 * 1024 * 1024),           # explicit budget; actual use ~1-2 MiB
    )(xt, w2p, aux)

    return out[0, :B].reshape(B, 1)


def init_params(key):
    """PyTorch-default-style init; torch layouts: W (out, in), b (out,)."""
    ks = jax.random.split(key, 6)

    def linear(kw, kb, fan_in, fan_out):
        bound = 1.0 / jnp.sqrt(jnp.float32(fan_in))
        w = jax.random.uniform(kw, (fan_out, fan_in), jnp.float32, -bound, bound)
        b = jax.random.uniform(kb, (fan_out,), jnp.float32, -bound, bound)
        return w, b

    w1, b1 = linear(ks[0], ks[1], 8, 50)    # F6
    w2, b2 = linear(ks[2], ks[3], 50, 50)   # F7
    w3, b3 = linear(ks[4], ks[5], 50, 1)    # OUT
    return (w1, b1, w2, b2, w3, b3)


def pack_params(params, compute_dtype=jnp.bfloat16):
    """Zero-pad hidden 50 -> H=64 and pack into (w2p, aux) for the kernel.

    w2p: (H, H) F7 weight in `compute_dtype` (MXU operand; bf16 default, f32 optional).
    aux: (H, AUX_W) f32: cols [0:8]=F6 weight, 8=b1, 9=b2, 10=OUT weight, 11=OUT bias.
    """
    w1, b1, w2, b2, w3, b3 = params
    d1, d_in = w1.shape           # (50, 8)
    d2 = w2.shape[0]              # 50

    w2p = jnp.zeros((H, H), jnp.float32).at[:d2, :d1].set(w2).astype(compute_dtype)

    aux = jnp.zeros((H, AUX_W), jnp.float32)
    aux = aux.at[:d1, 0:d_in].set(w1)
    aux = aux.at[:d1, IN_F].set(b1)
    aux = aux.at[:d2, IN_F + 1].set(b2)
    aux = aux.at[:w3.shape[1], IN_F + 2].set(w3[0, :])
    aux = aux.at[0, IN_F + 3].set(b3[0])
    return w2p, aux


def reference(x, params):
    w1, b1, w2, b2, w3, b3 = params
    h = jnp.maximum(x @ w1.T + b1, 0.0)
    h = jnp.maximum(h @ w2.T + b2, 0.0)
    return h @ w3.T + b3


if __name__ == "__main__":
    key = jax.random.PRNGKey(0)
    kx, kp = jax.random.split(key)
    params = init_params(kp)

    B = 256
    x = jax.random.normal(kx, (B, IN_F), dtype=jnp.float32)
    ref = reference(x, params)

    # Default throughput path: bf16 MXU operands, f32 accumulation / bias / ReLU / output.
    # (x and the layer-1 weights stay f32, so input rounding is not an error term.)
    out = jax.block_until_ready(on_classify_v1(x, pack_params(params)))
    assert out.shape == (B, 1), out.shape
    assert jnp.allclose(out, ref, atol=5e-2, rtol=5e-2), "bf16 path mismatch vs reference"

    # f32 MXU path (tighter tolerance; matches the PyTorch module's forward semantics).
    out_f32 = jax.block_until_ready(
        on_classify_v1(x, pack_params(params, jnp.float32), block_b=128))
    assert out_f32.shape == (B, 1), out_f32.shape
    assert jnp.allclose(out_f32, ref, atol=1e-4, rtol=1e-4), "f32 path mismatch vs reference"

    # Small / ragged batch (pad-to-tile + slice-back, single grid step).
    out_s = jax.block_until_ready(on_classify_v1(x[:8], pack_params(params, jnp.float32)))
    assert out_s.shape == (8, 1), out_s.shape
    assert jnp.allclose(out_s, ref[:8], atol=1e-4, rtol=1e-4), "small-B mismatch"

    print("KERNEL_OK")
</pallas_src>

<mosaic_0001>
module attributes {stable_mosaic.version = 11 : i64} {
  func.func @mlp_kernel(%arg0: i32, %arg1: memref<8x128xf32, #tpu.memory_space<vmem>>, %arg2: memref<64x64xbf16, #tpu.memory_space<vmem>>, %arg3: memref<64x16xf32, #tpu.memory_space<vmem>>, %arg4: memref<1x128xf32, #tpu.memory_space<vmem>>) attributes {dimension_semantics = [#tpu.dimension_semantics<parallel>], iteration_bounds = array<i64: 2>, scalar_prefetch = 0 : i64, scratch_operands = 0 : i64, tpu.core_type = #tpu.core_type<tc>, window_params = [{transform_indices = @transform_0, window_bounds = array<i64: 8, 128>}, {pipeline_mode = #tpu.pipeline_mode<synchronous>, transform_indices = @transform_1, window_bounds = array<i64: 64, 64>}, {pipeline_mode = #tpu.pipeline_mode<synchronous>, transform_indices = @transform_2, window_bounds = array<i64: 64, 16>}, {transform_indices = @transform_3, window_bounds = array<i64: 1, 128>}]} {
    %c0 = arith.constant 0 : index
    %c0_0 = arith.constant 0 : index
    %0 = vector.load %arg3[%c0, %c0_0] : memref<64x16xf32, #tpu.memory_space<vmem>>, vector<64x8xf32>
    %c0_1 = arith.constant 0 : index
    %c8 = arith.constant 8 : index
    %1 = vector.load %arg3[%c0_1, %c8] : memref<64x16xf32, #tpu.memory_space<vmem>>, vector<64x1xf32>
    %c0_2 = arith.constant 0 : index
    %c9 = arith.constant 9 : index
    %2 = vector.load %arg3[%c0_2, %c9] : memref<64x16xf32, #tpu.memory_space<vmem>>, vector<64x1xf32>
    %c0_3 = arith.constant 0 : index
    %c10 = arith.constant 10 : index
    %3 = vector.load %arg3[%c0_3, %c10] : memref<64x16xf32, #tpu.memory_space<vmem>>, vector<64x1xf32>
    %c0_4 = arith.constant 0 : index
    %c11 = arith.constant 11 : index
    %4 = vector.load %arg3[%c0_4, %c11] : memref<64x16xf32, #tpu.memory_space<vmem>>, vector<1x1xf32>
    %c0_5 = arith.constant 0 : index
    %c0_6 = arith.constant 0 : index
    %5 = vector.load %arg1[%c0_5, %c0_6] : memref<8x128xf32, #tpu.memory_space<vmem>>, vector<8x128xf32>
    %6 = vector.extract_strided_slice %0 {offsets = [0, 0], sizes = [64, 1], strides = [1, 1]} : vector<64x8xf32> to vector<64x1xf32>
    %7 = vector.extract_strided_slice %5 {offsets = [0, 0], sizes = [1, 128], strides = [1, 1]} : vector<8x128xf32> to vector<1x128xf32>
    %8 = vector.broadcast %6 : vector<64x1xf32> to vector<64x128xf32>
    %9 = vector.broadcast %7 : vector<1x128xf32> to vector<64x128xf32>
    %10 = arith.mulf %8, %9 : vector<64x128xf32>
    %11 = vector.extract_strided_slice %0 {offsets = [0, 1], sizes = [64, 1], strides = [1, 1]} : vector<64x8xf32> to vector<64x1xf32>
    %12 = vector.extract_strided_slice %5 {offsets = [1, 0], sizes = [1, 128], strides = [1, 1]} : vector<8x128xf32> to vector<1x128xf32>
    %13 = vector.broadcast %11 : vector<64x1xf32> to vector<64x128xf32>
    %14 = vector.broadcast %12 : vector<1x128xf32> to vector<64x128xf32>
    %15 = arith.mulf %13, %14 : vector<64x128xf32>
    %16 = arith.addf %10, %15 : vector<64x128xf32>
    %17 = vector.extract_strided_slice %0 {offsets = [0, 2], sizes = [64, 1], strides = [1, 1]} : vector<64x8xf32> to vector<64x1xf32>
    %18 = vector.extract_strided_slice %5 {offsets = [2, 0], sizes = [1, 128], strides = [1, 1]} : vector<8x128xf32> to vector<1x128xf32>
    %19 = vector.broadcast %17 : vector<64x1xf32> to vector<64x128xf32>
    %20 = vector.broadcast %18 : vector<1x128xf32> to vector<64x128xf32>
    %21 = arith.mulf %19, %20 : vector<64x128xf32>
    %22 = arith.addf %16, %21 : vector<64x128xf32>
    %23 = vector.extract_strided_slice %0 {offsets = [0, 3], sizes = [64, 1], strides = [1, 1]} : vector<64x8xf32> to vector<64x1xf32>
    %24 = vector.extract_strided_slice %5 {offsets = [3, 0], sizes = [1, 128], strides = [1, 1]} : vector<8x128xf32> to vector<1x128xf32>
    %25 = vector.broadcast %23 : vector<64x1xf32> to vector<64x128xf32>
    %26 = vector.broadcast %24 : vector<1x128xf32> to vector<64x128xf32>
    %27 = arith.mulf %25, %26 : vector<64x128xf32>
    %28 = arith.addf %22, %27 : vector<64x128xf32>
    %29 = vector.extract_strided_slice %0 {offsets = [0, 4], sizes = [64, 1], strides = [1, 1]} : vector<64x8xf32> to vector<64x1xf32>
    %30 = vector.extract_strided_slice %5 {offsets = [4, 0], sizes = [1, 128], strides = [1, 1]} : vector<8x128xf32> to vector<1x128xf32>
    %31 = vector.broadcast %29 : vector<64x1xf32> to vector<64x128xf32>
    %32 = vector.broadcast %30 : vector<1x128xf32> to vector<64x128xf32>
    %33 = arith.mulf %31, %32 : vector<64x128xf32>
    %34 = arith.addf %28, %33 : vector<64x128xf32>
    %35 = vector.extract_strided_slice %0 {offsets = [0, 5], sizes = [64, 1], strides = [1, 1]} : vector<64x8xf32> to vector<64x1xf32>
    %36 = vector.extract_strided_slice %5 {offsets = [5, 0], sizes = [1, 128], strides = [1, 1]} : vector<8x128xf32> to vector<1x128xf32>
    %37 = vector.broadcast %35 : vector<64x1xf32> to vector<64x128xf32>
    %38 = vector.broadcast %36 : vector<1x128xf32> to vector<64x128xf32>
    %39 = arith.mulf %37, %38 : vector<64x128xf32>
    %40 = arith.addf %34, %39 : vector<64x128xf32>
    %41 = vector.extract_strided_slice %0 {offsets = [0, 6], sizes = [64, 1], strides = [1, 1]} : vector<64x8xf32> to vector<64x1xf32>
    %42 = vector.extract_strided_slice %5 {offsets = [6, 0], sizes = [1, 128], strides = [1, 1]} : vector<8x128xf32> to vector<1x128xf32>
    %43 = vector.broadcast %41 : vector<64x1xf32> to vector<64x128xf32>
    %44 = vector.broadcast %42 : vector<1x128xf32> to vector<64x128xf32>
    %45 = arith.mulf %43, %44 : vector<64x128xf32>
    %46 = arith.addf %40, %45 : vector<64x128xf32>
    %47 = vector.extract_strided_slice %0 {offsets = [0, 7], sizes = [64, 1], strides = [1, 1]} : vector<64x8xf32> to vector<64x1xf32>
    %48 = vector.extract_strided_slice %5 {offsets = [7, 0], sizes = [1, 128], strides = [1, 1]} : vector<8x128xf32> to vector<1x128xf32>
    %49 = vector.broadcast %47 : vector<64x1xf32> to vector<64x128xf32>
    %50 = vector.broadcast %48 : vector<1x128xf32> to vector<64x128xf32>
    %51 = arith.mulf %49, %50 : vector<64x128xf32>
    %52 = arith.addf %46, %51 : vector<64x128xf32>
    %53 = vector.broadcast %1 : vector<64x1xf32> to vector<64x128xf32>
    %54 = arith.addf %52, %53 : vector<64x128xf32>
    %cst = arith.constant 0.000000e+00 : f32
    %55 = vector.broadcast %cst : f32 to vector<64x128xf32>
    %56 = arith.maximumf %54, %55 : vector<64x128xf32>
    %c0_7 = arith.constant 0 : index
    %c0_8 = arith.constant 0 : index
    %57 = vector.load %arg2[%c0_7, %c0_8] : memref<64x64xbf16, #tpu.memory_space<vmem>>, vector<64x64xbf16>
    %58 = arith.truncf %56 : vector<64x128xf32> to vector<64x128xbf16>
    %cst_9 = arith.constant dense<0.000000e+00> : vector<64x128xf32>
    %59 = tpu.matmul %57, %58, %cst_9 {dimension_numbers = #tpu.dot_dimension_numbers<[1], [0], [0], [1], [0, 0, 1, 1], [], []>} : vector<64x64xbf16>, vector<64x128xbf16>, vector<64x128xf32> -> vector<64x128xf32>
    %60 = vector.broadcast %2 : vector<64x1xf32> to vector<64x128xf32>
    %61 = arith.addf %59, %60 : vector<64x128xf32>
    %cst_10 = arith.constant 0.000000e+00 : f32
    %62 = vector.broadcast %cst_10 : f32 to vector<64x128xf32>
    %63 = arith.maximumf %61, %62 : vector<64x128xf32>
    %64 = vector.broadcast %3 : vector<64x1xf32> to vector<64x128xf32>
    %65 = arith.mulf %63, %64 : vector<64x128xf32>
    %cst_11 = arith.constant dense<0.000000e+00> : vector<128xf32>
    %66 = vector.multi_reduction <add>, %65, %cst_11 [0] : vector<64x128xf32> to vector<128xf32>
    %67 = vector.shape_cast %66 : vector<128xf32> to vector<1x128xf32>
    %68 = vector.broadcast %4 : vector<1x1xf32> to vector<1x128xf32>
    %69 = arith.addf %67, %68 : vector<1x128xf32>
    %c0_12 = arith.constant 0 : index
    %c0_13 = arith.constant 0 : index
    %70 = vector.load %arg4[%c0_12, %c0_13] : memref<1x128xf32, #tpu.memory_space<vmem>>, vector<1x128xf32>
    tpu.vector_store %arg4[%c0_12, %c0_13], %69 {strides = array<i32>} : memref<1x128xf32, #tpu.memory_space<vmem>>, vector<1x128xf32>,
    return
  }
  func.func @transform_0(%arg0: i32) -> (i32, i32) {
    %c0_i32 = arith.constant 0 : i32
    %c0_i32_0 = arith.constant 0 : i32
    return %c0_i32, %arg0 : i32, i32
  }
  func.func @transform_1(%arg0: i32) -> (i32, i32) {
    %c0_i32 = arith.constant 0 : i32
    %c0_i32_0 = arith.constant 0 : i32
    %c0_i32_1 = arith.constant 0 : i32
    return %c0_i32, %c0_i32_0 : i32, i32
  }
  func.func @transform_2(%arg0: i32) -> (i32, i32) {
    %c0_i32 = arith.constant 0 : i32
    %c0_i32_0 = arith.constant 0 : i32
    %c0_i32_1 = arith.constant 0 : i32
    return %c0_i32, %c0_i32_0 : i32, i32
  }
  func.func @transform_3(%arg0: i32) -> (i32, i32) {
    %c0_i32 = arith.constant 0 : i32
    %c0_i32_0 = arith.constant 0 : i32
    return %c0_i32, %arg0 : i32, i32
  }
}

</mosaic_0001>

<llo_original>
// kernel: on_classify_v1.1
$region0: #{on_classify_v1.1}
  #allocation0 [shape = 'u32[]', space=smem, size = 0x4, offset = 0x4, fixed_abs, tag = 'smem constant byte address 0x4 - core index']
  #allocation1 [shape = 'u32[72,128]{1,0:T(1,128)}', space=vmem, size = 0x9000, scoped, tag = 'internal scratch']
  %s0 = inlined_call_operand.vmem [shape: f32[8,256], index: 0, kind: input, shape index: {}]
  %s1 = inlined_call_operand.vmem [shape: bf16[64,64], index: 1, kind: input, shape index: {}]
  %s2 = inlined_call_operand.vmem [shape: f32[64,16], index: 2, kind: input, shape index: {}]
  %s3 = inlined_call_operand.hbm [shape: f32[1,256], index: 3, kind: output, shape index: {}]
  %s4 = sld [smem:[#allocation0]]
  $region45: #{on_classify_v1.1} parent=0
    _
  %s6 = ssub.s32 1, %s4
  %s7 = scalar_select 0, %s6, %s4
  $region1: #{on_classify_v1.1} parent=0
    #allocation2 [shape = 'u8[1024]{0}', space=vmem, size = 0x400, scoped, tag = 'output window, operand 0']
    #allocation3 [shape = 's32[2]{0}', space=sflag, size = 0x8, scoped, tag = 'scoped memory for on_classify_v1.1']
    %8 = vsyncpa [#allocation3], 0
    %s9 = scalar_lea.sflag [#allocation3], 1
    %10 = vsyncpa %s9, 0
    loop: start=0, step=1, limit=4
    $region2: #{on_classify_v1.1} parent=1 // loop_pre_header
      _
    $region3: #{on_classify_v1.1} parent=1 // loop_header
      %s12 = sphi 0, %s16
      %p13 = scmp.ge.s32.totalorder %s12, 4
      %s22 = sphi 0, %s24
      %s25 = sphi 0, %s22
      %s26 = sphi 0, %s25
      %s42 = sphi 0, %s26
      %s46 = sphi 0, %s46
      %s48 = sphi 0, %s46
      %s49 = sphi 0, %s48
      %s63 = sphi 0, %s49
      %s67 = sphi 0, %s67
      %s69 = sphi 0, %s67
      %s70 = sphi 0, %s69
      %s84 = sphi 0, %s70
      %s90 = sphi 0, %s92
      %s93 = sphi 0, %s90
      %s94 = sphi 0, %s93
      %s110 = sphi 0, %s94
    $region4: #{on_classify_v1.1} parent=1 // loop_header_branch
      %15 = sbr.rel (%p13) target = $region8
    $region5: #{on_classify_v1.1} parent=1 // loop_body
      %s17 = ssub.s32 %s12, 1
      %s18 = ssub.s32 %s12, 2
      %s19 = sadd.s32 %s12, 1
      %s20 = ssub.s32 %s12, %s19
      %p21 = scmp.eq.s32.totalorder %s20, 0
      %s23 = sadd.s32 %s22, 1
      %s24 = scalar_select %p21, %s22, %s23
      %p27 = pneg %p21
      %p28 = scmp.eq.s32.totalorder %s12, 1
      %p29 = por %p27, %p28
      %p30 = scmp.ne.s32.totalorder %s22, %s25
      %p31 = scmp.eq.s32.totalorder %s12, 0
      %p32 = por %p30, %p31
      %p33 = scmp.ne.s32.totalorder %s22, %s25
      %p34 = scmp.eq.s32.totalorder %s17, 1
      %p35 = por %p33, %p34
      %p36 = scmp.ne.s32.totalorder %s25, %s26
      %p37 = scmp.eq.s32.totalorder %s17, 0
      %p38 = por %p36, %p37
      %p39 = scmp.ne.s32.totalorder %s25, %s26
      %p40 = scmp.eq.s32.totalorder %s18, 1
      %p41 = por %p39, %p40
      %p43 = scmp.ne.s32.totalorder %s26, %s42
      %p44 = scmp.eq.s32.totalorder %s18, 0
      %p45 = por %p43, %p44
      %s47 = sadd.s32 %s46, 1
      %p50 = scmp.eq.s32.totalorder %s12, 1
      %p51 = scmp.ne.s32.totalorder %s46, %s48
      %p52 = scmp.eq.s32.totalorder %s12, 0
      %p53 = por %p51, %p52
      %p54 = scmp.ne.s32.totalorder %s46, %s48
      %p55 = scmp.eq.s32.totalorder %s17, 1
      %p56 = por %p54, %p55
      %p57 = scmp.ne.s32.totalorder %s48, %s49
      %p58 = scmp.eq.s32.totalorder %s17, 0
      %p59 = por %p57, %p58
      %p60 = scmp.ne.s32.totalorder %s48, %s49
      %p61 = scmp.eq.s32.totalorder %s18, 1
      %p62 = por %p60, %p61
      %p64 = scmp.ne.s32.totalorder %s49, %s63
      %p65 = scmp.eq.s32.totalorder %s18, 0
      %p66 = por %p64, %p65
      %s68 = sadd.s32 %s67, 1
      %p71 = scmp.eq.s32.totalorder %s12, 1
      %p72 = scmp.ne.s32.totalorder %s67, %s69
      %p73 = scmp.eq.s32.totalorder %s12, 0
      %p74 = por %p72, %p73
      %p75 = scmp.ne.s32.totalorder %s67, %s69
      %p76 = scmp.eq.s32.totalorder %s17, 1
      %p77 = por %p75, %p76
      %p78 = scmp.ne.s32.totalorder %s69, %s70
      %p79 = scmp.eq.s32.totalorder %s17, 0
      %p80 = por %p78, %p79
      %p81 = scmp.ne.s32.totalorder %s69, %s70
      %p82 = scmp.eq.s32.totalorder %s18, 1
      %p83 = por %p81, %p82
      %p85 = scmp.ne.s32.totalorder %s70, %s84
      %p86 = scmp.eq.s32.totalorder %s18, 0
      %p87 = por %p85, %p86
      %s88 = ssub.s32 %s12, %s19
      %p89 = scmp.eq.s32.totalorder %s88, 0
      %s91 = sadd.s32 %s90, 1
      %s92 = scalar_select %p89, %s90, %s91
      %p95 = pneg %p89
      %p96 = scmp.eq.s32.totalorder %s12, 1
      %p97 = por %p95, %p96
      %p98 = scmp.ne.s32.totalorder %s90, %s93
      %p99 = scmp.eq.s32.totalorder %s12, 0
      %p100 = por %p98, %p99
      %p101 = scmp.ne.s32.totalorder %s90, %s93
      %p102 = scmp.eq.s32.totalorder %s17, 1
      %p103 = por %p101, %p102
      %p104 = scmp.ne.s32.totalorder %s93, %s94
      %p105 = scmp.eq.s32.totalorder %s17, 0
      %p106 = por %p104, %p105
      %p107 = scmp.ne.s32.totalorder %s93, %s94
      %p108 = scmp.eq.s32.totalorder %s18, 1
      %p109 = por %p107, %p108
      %p111 = scmp.ne.s32.totalorder %s94, %s110
      %p112 = scmp.eq.s32.totalorder %s18, 0
      %p113 = por %p111, %p112
      %p114 = scmp.le.s32.totalorder 1, %s12
      %p115 = scmp.lt.s32.totalorder %s12, 3
      %p116 = pnand %p114, %p115
      %p117 = pneg %p116
      // Predicated region
      $region9: #{on_classify_v1.1} parent=5 // pred_check
        _
      $region10: #{on_classify_v1.1} parent=5 // pred_check_branch
        %119 = sbr.rel (%p116) target = $region12
      $region11: #{on_classify_v1.1} parent=5 // pred_region
        %s120 = ssub.s32 %s12, 1
        // Predicated region
        $region13: #{on_classify_v1.1} parent=11 // pred_check
          %p121 = pneg %p59
        $region14: #{on_classify_v1.1} parent=11 // pred_check_branch
          %123 = sbr.rel (%p121) target = $region16
        $region15: #{on_classify_v1.1} parent=11 // pred_region
          _
        $region16: #{on_classify_v1.1} parent=11 // pred_fallthru
          _
        // Predicated region
        $region17: #{on_classify_v1.1} parent=11 // pred_check
          %p124 = pneg %p80
        $region18: #{on_classify_v1.1} parent=11 // pred_check_branch
          %126 = sbr.rel (%p124) target = $region20
        $region19: #{on_classify_v1.1} parent=11 // pred_region
          _
        $region20: #{on_classify_v1.1} parent=11 // pred_fallthru
          _
      $region12: #{on_classify_v1.1} parent=5 // pred_fallthru
        _
      %p127 = scmp.lt.s32.totalorder %s12, 2
      // Predicated region
      $region21: #{on_classify_v1.1} parent=5 // pred_check
        %p128 = pneg %p127
      $region22: #{on_classify_v1.1} parent=5 // pred_check_branch
        %130 = sbr.rel (%p128) target = $region24
      $region23: #{on_classify_v1.1} parent=5 // pred_region
        // Predicated region
        $region25: #{on_classify_v1.1} parent=23 // pred_check
          %p131 = pneg %p32
        $region26: #{on_classify_v1.1} parent=23 // pred_check_branch
          %133 = sbr.rel (%p131) target = $region28
        $region27: #{on_classify_v1.1} parent=23 // pred_region
          %p134 = scmp.lt.s32.totalorder %s12, 1
          %s135 = scalar_select %p134, %s12, 1
          %s136 = smul.addr %s135, 8
          %s137 = scalar_lea.vmem %s0, %s136
        $region28: #{on_classify_v1.1} parent=23 // pred_fallthru
          _
      $region24: #{on_classify_v1.1} parent=5 // pred_fallthru
        _
      %p138 = scmp.le.s32.totalorder 1, %s12
      %p139 = scmp.lt.s32.totalorder %s12, 3
      %p140 = pnand %p138, %p139
      %p141 = pneg %p140
      // Predicated region
      $region29: #{on_classify_v1.1} parent=5 // pred_check
        _
      $region30: #{on_classify_v1.1} parent=5 // pred_check_branch
        %143 = sbr.rel (%p140) target = $region32
      $region31: #{on_classify_v1.1} parent=5 // pred_region
        %s144 = ssub.s32 %s12, 1
        %p145 = scmp.lt.s32.totalorder %s17, 1
        %s146 = scalar_select %p145, %s17, 1
        %s147 = smul.addr %s146, 8
        %s148 = scalar_lea.vmem %s0, %s147
        %p149 = pneg %p38
        %p150 = pneg %p35
        %p151 = pneg %p59
        %p152 = pneg %p56
        %p153 = pneg %p80
        %p154 = pneg %p77
        %p155 = pneg %p106
        %p156 = pneg %p103
        %s157 = sand.u32 %s93, 1
        %s158 = scalar_lea.sflag [#allocation3], %s157
        %s159 = sand.u32 %s93, 1
        %s160 = scalar_lea.vmem [#allocation2], %s159
        %p161 = scmp.lt.s32.totalorder %s17, 1
        %s162 = scalar_select %p161, %s17, 1
        %s163 = smul.addr %s162, 8
        %s164 = scalar_lea.vmem %s0, %s163
        %v166 = vld [vmem:[%s2] sm:$0xff]
        %v167 = vld [vmem:[%s2 + $0x8] sm:$0xff]
        %v168 = vld [vmem:[%s2 + $0x10] sm:$0xff]
        %v169 = vld [vmem:[%s2 + $0x18] sm:$0xff]
        %v170 = vld [vmem:[%s2 + $0x20] sm:$0xff]
        %v171 = vld [vmem:[%s2 + $0x28] sm:$0xff]
        %v172 = vld [vmem:[%s2 + $0x30] sm:$0xff]
        %v173 = vld [vmem:[%s2 + $0x38] sm:$0xff]
        %v174 = vld [vmem:[%s2] sm:$0x1]
        %v175 = vld [vmem:[%s164] sm:$0xff]
        %177 = vset.pattern.permute.xlu0 0
        %178 = vperm.xlu0 %177, %v166
        %v179 = vpop.permute.xlu0 %178
        %182 = vset.pattern.permute.xlu0 0
        %183 = vperm.xlu0 %182, %v167
        %v184 = vpop.permute.xlu0 %183
        %187 = vset.pattern.permute.xlu0 0
        %188 = vperm.xlu0 %187, %v168
        %v189 = vpop.permute.xlu0 %188
        %192 = vset.pattern.permute.xlu0 0
        %193 = vperm.xlu0 %192, %v169
        %v194 = vpop.permute.xlu0 %193
        %197 = vset.pattern.permute.xlu0 0
        %198 = vperm.xlu0 %197, %v170
        %v199 = vpop.permute.xlu0 %198
        %202 = vset.pattern.permute.xlu0 0
        %203 = vperm.xlu0 %202, %v171
        %v204 = vpop.permute.xlu0 %203
        %207 = vset.pattern.permute.xlu0 0
        %208 = vperm.xlu0 %207, %v172
        %v209 = vpop.permute.xlu0 %208
        %212 = vset.pattern.permute.xlu0 0
        %213 = vperm.xlu0 %212, %v173
        %v214 = vpop.permute.xlu0 %213
        %v216 = vperm.slane %v175, 0
        %v217 = vmul.f32 %v179, %v216
        %v218 = vmul.f32 %v184, %v216
        %v219 = vmul.f32 %v189, %v216
        %v220 = vmul.f32 %v194, %v216
        %v221 = vmul.f32 %v199, %v216
        %v222 = vmul.f32 %v204, %v216
        %v223 = vmul.f32 %v209, %v216
        %v224 = vmul.f32 %v214, %v216
        %225 = vset.pattern.permute.xlu0 1
        %226 = vperm.xlu0 %225, %v166
        %v227 = vpop.permute.xlu0 %226
        %229 = vset.pattern.permute.xlu0 1
        %230 = vperm.xlu0 %229, %v167
        %v231 = vpop.permute.xlu0 %230
        %233 = vset.pattern.permute.xlu0 1
        %234 = vperm.xlu0 %233, %v168
        %v235 = vpop.permute.xlu0 %234
        %237 = vset.pattern.permute.xlu0 1
        %238 = vperm.xlu0 %237, %v169
        %v239 = vpop.permute.xlu0 %238
        %241 = vset.pattern.permute.xlu0 1
        %242 = vperm.xlu0 %241, %v170
        %v243 = vpop.permute.xlu0 %242
        %245 = vset.pattern.permute.xlu0 1
        %246 = vperm.xlu0 %245, %v171
        %v247 = vpop.permute.xlu0 %246
        %249 = vset.pattern.permute.xlu0 1
        %250 = vperm.xlu0 %249, %v172
        %v251 = vpop.permute.xlu0 %250
        %253 = vset.pattern.permute.xlu0 1
        %254 = vperm.xlu0 %253, %v173
        %v255 = vpop.permute.xlu0 %254
        %v257 = vperm.slane %v175, 1
        %v258 = vmul.f32 %v227, %v257
        %v259 = vmul.f32 %v231, %v257
        %v260 = vmul.f32 %v235, %v257
        %v261 = vmul.f32 %v239, %v257
        %v262 = vmul.f32 %v243, %v257
        %v263 = vmul.f32 %v247, %v257
        %v264 = vmul.f32 %v251, %v257
        %v265 = vmul.f32 %v255, %v257
        %v266 = vadd.f32 %v217, %v258
        %v267 = vadd.f32 %v218, %v259
        %v268 = vadd.f32 %v219, %v260
        %v269 = vadd.f32 %v220, %v261
        %v270 = vadd.f32 %v221, %v262
        %v271 = vadd.f32 %v222, %v263
        %v272 = vadd.f32 %v223, %v264
        %v273 = vadd.f32 %v224, %v265
        %274 = vset.pattern.permute.xlu0 2
        %275 = vperm.xlu0 %274, %v166
        %v276 = vpop.permute.xlu0 %275
        %278 = vset.pattern.permute.xlu0 2
        %279 = vperm.xlu0 %278, %v167
        %v280 = vpop.permute.xlu0 %279
        %282 = vset.pattern.permute.xlu0 2
        %283 = vperm.xlu0 %282, %v168
        %v284 = vpop.permute.xlu0 %283
        %286 = vset.pattern.permute.xlu0 2
        %287 = vperm.xlu0 %286, %v169
        %v288 = vpop.permute.xlu0 %287
        %290 = vset.pattern.permute.xlu0 2
        %291 = vperm.xlu0 %290, %v170
        %v292 = vpop.permute.xlu0 %291
        %294 = vset.pattern.permute.xlu0 2
        %295 = vperm.xlu0 %294, %v171
        %v296 = vpop.permute.xlu0 %295
        %298 = vset.pattern.permute.xlu0 2
        %299 = vperm.xlu0 %298, %v172
        %v300 = vpop.permute.xlu0 %299
        %302 = vset.pattern.permute.xlu0 2
        %303 = vperm.xlu0 %302, %v173
        %v304 = vpop.permute.xlu0 %303
        %v306 = vperm.slane %v175, 2
        %v307 = vmul.f32 %v276, %v306
        %v308 = vmul.f32 %v280, %v306
        %v309 = vmul.f32 %v284, %v306
        %v310 = vmul.f32 %v288, %v306
        %v311 = vmul.f32 %v292, %v306
        %v312 = vmul.f32 %v296, %v306
        %v313 = vmul.f32 %v300, %v306
        %v314 = vmul.f32 %v304, %v306
        %v315 = vadd.f32 %v266, %v307
        %v316 = vadd.f32 %v267, %v308
        %v317 = vadd.f32 %v268, %v309
        %v318 = vadd.f32 %v269, %v310
        %v319 = vadd.f32 %v270, %v311
        %v320 = vadd.f32 %v271, %v312
        %v321 = vadd.f32 %v272, %v313
        %v322 = vadd.f32 %v273, %v314
        %323 = vset.pattern.permute.xlu0 3
        %324 = vperm.xlu0 %323, %v166
        %v325 = vpop.permute.xlu0 %324
        %327 = vset.pattern.permute.xlu0 3
        %328 = vperm.xlu0 %327, %v167
        %v329 = vpop.permute.xlu0 %328
        %331 = vset.pattern.permute.xlu0 3
        %332 = vperm.xlu0 %331, %v168
        %v333 = vpop.permute.xlu0 %332
        %335 = vset.pattern.permute.xlu0 3
        %336 = vperm.xlu0 %335, %v169
        %v337 = vpop.permute.xlu0 %336
        %339 = vset.pattern.permute.xlu0 3
        %340 = vperm.xlu0 %339, %v170
        %v341 = vpop.permute.xlu0 %340
        %343 = vset.pattern.permute.xlu0 3
        %344 = vperm.xlu0 %343, %v171
        %v345 = vpop.permute.xlu0 %344
        %347 = vset.pattern.permute.xlu0 3
        %348 = vperm.xlu0 %347, %v172
        %v349 = vpop.permute.xlu0 %348
        %351 = vset.pattern.permute.xlu0 3
        %352 = vperm.xlu0 %351, %v173
        %v353 = vpop.permute.xlu0 %352
        %v355 = vperm.slane %v175, 3
        %v356 = vmul.f32 %v325, %v355
        %v357 = vmul.f32 %v329, %v355
        %v358 = vmul.f32 %v333, %v355
        %v359 = vmul.f32 %v337, %v355
        %v360 = vmul.f32 %v341, %v355
        %v361 = vmul.f32 %v345, %v355
        %v362 = vmul.f32 %v349, %v355
        %v363 = vmul.f32 %v353, %v355
        %v364 = vadd.f32 %v315, %v356
        %v365 = vadd.f32 %v316, %v357
        %v366 = vadd.f32 %v317, %v358
        %v367 = vadd.f32 %v318, %v359
        %v368 = vadd.f32 %v319, %v360
        %v369 = vadd.f32 %v320, %v361
        %v370 = vadd.f32 %v321, %v362
        %v371 = vadd.f32 %v322, %v363
        %372 = vset.pattern.permute.xlu0 4
        %373 = vperm.xlu0 %372, %v166
        %v374 = vpop.permute.xlu0 %373
        %376 = vset.pattern.permute.xlu0 4
        %377 = vperm.xlu0 %376, %v167
        %v378 = vpop.permute.xlu0 %377
        %380 = vset.pattern.permute.xlu0 4
        %381 = vperm.xlu0 %380, %v168
        %v382 = vpop.permute.xlu0 %381
        %384 = vset.pattern.permute.xlu0 4
        %385 = vperm.xlu0 %384, %v169
        %v386 = vpop.permute.xlu0 %385
        %388 = vset.pattern.permute.xlu0 4
        %389 = vperm.xlu0 %388, %v170
        %v390 = vpop.permute.xlu0 %389
        %392 = vset.pattern.permute.xlu0 4
        %393 = vperm.xlu0 %392, %v171
        %v394 = vpop.permute.xlu0 %393
        %396 = vset.pattern.permute.xlu0 4
        %397 = vperm.xlu0 %396, %v172
        %v398 = vpop.permute.xlu0 %397
        %400 = vset.pattern.permute.xlu0 4
        %401 = vperm.xlu0 %400, %v173
        %v402 = vpop.permute.xlu0 %401
        %v404 = vperm.slane %v175, 4
        %v405 = vmul.f32 %v374, %v404
        %v406 = vmul.f32 %v378, %v404
        %v407 = vmul.f32 %v382, %v404
        %v408 = vmul.f32 %v386, %v404
        %v409 = vmul.f32 %v390, %v404
        %v410 = vmul.f32 %v394, %v404
        %v411 = vmul.f32 %v398, %v404
        %v412 = vmul.f32 %v402, %v404
        %v413 = vadd.f32 %v364, %v405
        %v414 = vadd.f32 %v365, %v406
        %v415 = vadd.f32 %v366, %v407
        %v416 = vadd.f32 %v367, %v408
        %v417 = vadd.f32 %v368, %v409
        %v418 = vadd.f32 %v369, %v410
        %v419 = vadd.f32 %v370, %v411
        %v420 = vadd.f32 %v371, %v412
        %421 = vset.pattern.permute.xlu0 5
        %422 = vperm.xlu0 %421, %v166
        %v423 = vpop.permute.xlu0 %422
        %425 = vset.pattern.permute.xlu0 5
        %426 = vperm.xlu0 %425, %v167
        %v427 = vpop.permute.xlu0 %426
        %429 = vset.pattern.permute.xlu0 5
        %430 = vperm.xlu0 %429, %v168
        %v431 = vpop.permute.xlu0 %430
        %433 = vset.pattern.permute.xlu0 5
        %434 = vperm.xlu0 %433, %v169
        %v435 = vpop.permute.xlu0 %434
        %437 = vset.pattern.permute.xlu0 5
        %438 = vperm.xlu0 %437, %v170
        %v439 = vpop.permute.xlu0 %438
        %441 = vset.pattern.permute.xlu0 5
        %442 = vperm.xlu0 %441, %v171
        %v443 = vpop.permute.xlu0 %442
        %445 = vset.pattern.permute.xlu0 5
        %446 = vperm.xlu0 %445, %v172
        %v447 = vpop.permute.xlu0 %446
        %449 = vset.pattern.permute.xlu0 5
        %450 = vperm.xlu0 %449, %v173
        %v451 = vpop.permute.xlu0 %450
        %v453 = vperm.slane %v175, 5
        %v454 = vmul.f32 %v423, %v453
        %v455 = vmul.f32 %v427, %v453
        %v456 = vmul.f32 %v431, %v453
        %v457 = vmul.f32 %v435, %v453
        %v458 = vmul.f32 %v439, %v453
        %v459 = vmul.f32 %v443, %v453
        %v460 = vmul.f32 %v447, %v453
        %v461 = vmul.f32 %v451, %v453
        %v462 = vadd.f32 %v413, %v454
        %v463 = vadd.f32 %v414, %v455
        %v464 = vadd.f32 %v415, %v456
        %v465 = vadd.f32 %v416, %v457
        %v466 = vadd.f32 %v417, %v458
        %v467 = vadd.f32 %v418, %v459
        %v468 = vadd.f32 %v419, %v460
        %v469 = vadd.f32 %v420, %v461
        %470 = vset.pattern.permute.xlu0 6
        %471 = vperm.xlu0 %470, %v166
        %v472 = vpop.permute.xlu0 %471
        %474 = vset.pattern.permute.xlu0 6
        %475 = vperm.xlu0 %474, %v167
        %v476 = vpop.permute.xlu0 %475
        %478 = vset.pattern.permute.xlu0 6
        %479 = vperm.xlu0 %478, %v168
        %v480 = vpop.permute.xlu0 %479
        %482 = vset.pattern.permute.xlu0 6
        %483 = vperm.xlu0 %482, %v169
        %v484 = vpop.permute.xlu0 %483
        %486 = vset.pattern.permute.xlu0 6
        %487 = vperm.xlu0 %486, %v170
        %v488 = vpop.permute.xlu0 %487
        %490 = vset.pattern.permute.xlu0 6
        %491 = vperm.xlu0 %490, %v171
        %v492 = vpop.permute.xlu0 %491
        %494 = vset.pattern.permute.xlu0 6
        %495 = vperm.xlu0 %494, %v172
        %v496 = vpop.permute.xlu0 %495
        %498 = vset.pattern.permute.xlu0 6
        %499 = vperm.xlu0 %498, %v173
        %v500 = vpop.permute.xlu0 %499
        %v502 = vperm.slane %v175, 6
        %v503 = vmul.f32 %v472, %v502
        %v504 = vmul.f32 %v476, %v502
        %v505 = vmul.f32 %v480, %v502
        %v506 = vmul.f32 %v484, %v502
        %v507 = vmul.f32 %v488, %v502
        %v508 = vmul.f32 %v492, %v502
        %v509 = vmul.f32 %v496, %v502
        %v510 = vmul.f32 %v500, %v502
        %v511 = vadd.f32 %v462, %v503
        %v512 = vadd.f32 %v463, %v504
        %v513 = vadd.f32 %v464, %v505
        %v514 = vadd.f32 %v465, %v506
        %v515 = vadd.f32 %v466, %v507
        %v516 = vadd.f32 %v467, %v508
        %v517 = vadd.f32 %v468, %v509
        %v518 = vadd.f32 %v469, %v510
        %519 = vset.pattern.permute.xlu0 7
        %520 = vperm.xlu0 %519, %v166
        %v521 = vpop.permute.xlu0 %520
        %523 = vset.pattern.permute.xlu0 7
        %524 = vperm.xlu0 %523, %v167
        %v525 = vpop.permute.xlu0 %524
        %527 = vset.pattern.permute.xlu0 7
        %528 = vperm.xlu0 %527, %v168
        %v529 = vpop.permute.xlu0 %528
        %531 = vset.pattern.permute.xlu0 7
        %532 = vperm.xlu0 %531, %v169
        %v533 = vpop.permute.xlu0 %532
        %535 = vset.pattern.permute.xlu0 7
        %536 = vperm.xlu0 %535, %v170
        %v537 = vpop.permute.xlu0 %536
        %539 = vset.pattern.permute.xlu0 7
        %540 = vperm.xlu0 %539, %v171
        %v541 = vpop.permute.xlu0 %540
        %543 = vset.pattern.permute.xlu0 7
        %544 = vperm.xlu0 %543, %v172
        %v545 = vpop.permute.xlu0 %544
        %547 = vset.pattern.permute.xlu0 7
        %548 = vperm.xlu0 %547, %v173
        %v549 = vpop.permute.xlu0 %548
        %v551 = vperm.slane %v175, 7
        %v552 = vmul.f32 %v521, %v551
        %v553 = vmul.f32 %v525, %v551
        %v554 = vmul.f32 %v529, %v551
        %v555 = vmul.f32 %v533, %v551
        %v556 = vmul.f32 %v537, %v551
        %v557 = vmul.f32 %v541, %v551
        %v558 = vmul.f32 %v545, %v551
        %v559 = vmul.f32 %v549, %v551
        %v560 = vadd.f32 %v511, %v552
        %v561 = vadd.f32 %v512, %v553
        %v562 = vadd.f32 %v513, %v554
        %v563 = vadd.f32 %v514, %v555
        %v564 = vadd.f32 %v515, %v556
        %v565 = vadd.f32 %v516, %v557
        %v566 = vadd.f32 %v517, %v558
        %v567 = vadd.f32 %v518, %v559
        %568 = vset.pattern.permute.xlu0 8
        %569 = vperm.xlu0 %568, %v166
        %v570 = vpop.permute.xlu0 %569
        %572 = vset.pattern.permute.xlu0 8
        %573 = vperm.xlu0 %572, %v167
        %v574 = vpop.permute.xlu0 %573
        %576 = vset.pattern.permute.xlu0 8
        %577 = vperm.xlu0 %576, %v168
        %v578 = vpop.permute.xlu0 %577
        %580 = vset.pattern.permute.xlu0 8
        %581 = vperm.xlu0 %580, %v169
        %v582 = vpop.permute.xlu0 %581
        %584 = vset.pattern.permute.xlu0 8
        %585 = vperm.xlu0 %584, %v170
        %v586 = vpop.permute.xlu0 %585
        %588 = vset.pattern.permute.xlu0 8
        %589 = vperm.xlu0 %588, %v171
        %v590 = vpop.permute.xlu0 %589
        %592 = vset.pattern.permute.xlu0 8
        %593 = vperm.xlu0 %592, %v172
        %v594 = vpop.permute.xlu0 %593
        %596 = vset.pattern.permute.xlu0 8
        %597 = vperm.xlu0 %596, %v173
        %v598 = vpop.permute.xlu0 %597
        %v600 = vadd.f32 %v560, %v570
        %v601 = vadd.f32 %v561, %v574
        %v602 = vadd.f32 %v562, %v578
        %v603 = vadd.f32 %v563, %v582
        %v604 = vadd.f32 %v564, %v586
        %v605 = vadd.f32 %v565, %v590
        %v606 = vadd.f32 %v566, %v594
        %v607 = vadd.f32 %v567, %v598
        %v608 = vmax.f32 %v600, 0.0
        %v609 = vmax.f32 %v601, 0.0
        %v610 = vmax.f32 %v602, 0.0
        %v611 = vmax.f32 %v603, 0.0
        %v612 = vmax.f32 %v604, 0.0
        %v613 = vmax.f32 %v605, 0.0
        %v614 = vmax.f32 %v606, 0.0
        %v615 = vmax.f32 %v607, 0.0
        %v616 = vld [vmem:[%s1] sm:$0xf]
        %v617 = vld [vmem:[%s1 + $0x4] sm:$0xf]
        %v618 = vld [vmem:[%s1 + $0x8] sm:$0xf]
        %v619 = vld [vmem:[%s1 + $0xc] sm:$0xf]
        %v620 = vld [vmem:[%s1 + $0x10] sm:$0xf]
        %v621 = vld [vmem:[%s1 + $0x14] sm:$0xf]
        %v622 = vld [vmem:[%s1 + $0x18] sm:$0xf]
        %v623 = vld [vmem:[%s1 + $0x1c] sm:$0xf]
        %v624 = vpack.c.bf16 %v609, %v608
        %v625 = vpack.c.bf16 %v611, %v610
        %v626 = vpack.c.bf16 %v613, %v612
        %v627 = vpack.c.bf16 %v615, %v614
        %628 = vset.pattern.permute.xlu0 9
        %629 = vperm.xlu0 %628, %v166
        %v630 = vpop.permute.xlu0 %629
        %632 = vset.pattern.permute.xlu0 9
        %633 = vperm.xlu0 %632, %v167
        %v634 = vpop.permute.xlu0 %633
        %636 = vset.pattern.permute.xlu0 9
        %637 = vperm.xlu0 %636, %v168
        %v638 = vpop.permute.xlu0 %637
        %640 = vset.pattern.permute.xlu0 9
        %641 = vperm.xlu0 %640, %v169
        %v642 = vpop.permute.xlu0 %641
        %644 = vset.pattern.permute.xlu0 9
        %645 = vperm.xlu0 %644, %v170
        %v646 = vpop.permute.xlu0 %645
        %648 = vset.pattern.permute.xlu0 9
        %649 = vperm.xlu0 %648, %v171
        %v650 = vpop.permute.xlu0 %649
        %652 = vset.pattern.permute.xlu0 9
        %653 = vperm.xlu0 %652, %v172
        %v654 = vpop.permute.xlu0 %653
        %656 = vset.pattern.permute.xlu0 9
        %657 = vperm.xlu0 %656, %v173
        %v658 = vpop.permute.xlu0 %657
        %v668 = vunpack.c.l.b16 %v616
        %v669 = vunpack.c.l.b16 %v617
        %v670 = vunpack.c.l.b16 %v618
        %v671 = vunpack.c.l.b16 %v619
        %v672 = vunpack.c.l.b16 %v620
        %v673 = vunpack.c.l.b16 %v621
        %v674 = vunpack.c.l.b16 %v622
        %v675 = vunpack.c.l.b16 %v623
        %v676 = vpack.c.b16 %v669, %v668
        %v677 = vpack.c.b16 %v671, %v670
        %v678 = vpack.c.b16 %v673, %v672
        %v679 = vpack.c.b16 %v675, %v674
        %vm680 = vcmask 523264
        %v682 = vsel %vm680, %v676, 0
        %v685 = vsel %vm680, %v677, 0
        %v688 = vsel %vm680, %v678, 0
        %v691 = vsel %vm680, %v679, 0
        %693 = vmatpush.bf16.msra.mxu0 0
        %694 = vmatpush.bf16.msra.mxu0 0
        %695 = vmatpush.bf16.msra.mxu0 0
        %696 = vmatpush.bf16.msra.mxu0 0
        %697 = vmatpush.bf16.msra.mxu0 %v627
        %698 = vmatpush.bf16.msra.mxu0 %v626
        %699 = vmatpush.bf16.msra.mxu0 %v625
        %700 = vmatpush.bf16.msra.mxu0 %v624
        %701 = vmatmul.bf16.gmra.mxu0 %v682
        %v702 = vpop.f32.mrf.mxu0
        %v703 = vadd.f32 %v630, %v702
        %v704 = vpop.f32.mrf.mxu0
        %v705 = vadd.f32 %v634, %v704
        %706 = vmatmul.bf16.gmra.mxu0 %v685
        %v707 = vpop.f32.mrf.mxu0
        %v708 = vadd.f32 %v638, %v707
        %v709 = vpop.f32.mrf.mxu0
        %v710 = vadd.f32 %v642, %v709
        %711 = vmatmul.bf16.gmra.mxu0 %v688
        %v712 = vpop.f32.mrf.mxu0
        %v713 = vadd.f32 %v646, %v712
        %v714 = vpop.f32.mrf.mxu0
        %v715 = vadd.f32 %v650, %v714
        %716 = vmatmul.bf16.gmra.mxu0 %v691
        %v717 = vpop.f32.mrf.mxu0
        %v718 = vadd.f32 %v654, %v717
        %v719 = vpop.f32.mrf.mxu0
        %v720 = vadd.f32 %v658, %v719
        %721 = vdwg.mxu0
        %v722 = vmax.f32 %v703, 0.0
        %v723 = vmax.f32 %v705, 0.0
        %v724 = vmax.f32 %v708, 0.0
        %v725 = vmax.f32 %v710, 0.0
        %v726 = vmax.f32 %v713, 0.0
        %v727 = vmax.f32 %v715, 0.0
        %v728 = vmax.f32 %v718, 0.0
        %v729 = vmax.f32 %v720, 0.0
        %730 = vset.pattern.permute.xlu0 10
        %731 = vperm.xlu0 %730, %v166
        %v732 = vpop.permute.xlu0 %731
        %734 = vset.pattern.permute.xlu0 10
        %735 = vperm.xlu0 %734, %v167
        %v736 = vpop.permute.xlu0 %735
        %738 = vset.pattern.permute.xlu0 10
        %739 = vperm.xlu0 %738, %v168
        %v740 = vpop.permute.xlu0 %739
        %742 = vset.pattern.permute.xlu0 10
        %743 = vperm.xlu0 %742, %v169
        %v744 = vpop.permute.xlu0 %743
        %746 = vset.pattern.permute.xlu0 10
        %747 = vperm.xlu0 %746, %v170
        %v748 = vpop.permute.xlu0 %747
        %750 = vset.pattern.permute.xlu0 10
        %751 = vperm.xlu0 %750, %v171
        %v752 = vpop.permute.xlu0 %751
        %754 = vset.pattern.permute.xlu0 10
        %755 = vperm.xlu0 %754, %v172
        %v756 = vpop.permute.xlu0 %755
        %758 = vset.pattern.permute.xlu0 10
        %759 = vperm.xlu0 %758, %v173
        %v760 = vpop.permute.xlu0 %759
        %v762 = vmul.f32 %v722, %v732
        %v763 = vmul.f32 %v723, %v736
        %v764 = vmul.f32 %v724, %v740
        %v765 = vmul.f32 %v725, %v744
        %v766 = vmul.f32 %v726, %v748
        %v767 = vmul.f32 %v727, %v752
        %v768 = vmul.f32 %v728, %v756
        %v769 = vmul.f32 %v729, %v760
        %v770 = vadd.f32 %v762, %v763
        %v771 = vadd.f32 %v770, %v764
        %v772 = vadd.f32 %v771, %v765
        %v773 = vadd.f32 %v772, %v766
        %v774 = vadd.f32 %v773, %v767
        %v775 = vadd.f32 %v774, %v768
        %v776 = vadd.f32 %v775, %v769
        %v777 = vrot.slane %v776, 4
        %v778 = vadd.f32 %v776, %v777
        %v779 = vrot.slane %v778, 2
        %v780 = vadd.f32 %v778, %v779
        %v781 = vrot.slane %v780, 1
        %v782 = vadd.f32 %v780, %v781
        %784 = vset.pattern.permute.xlu0 11
        %785 = vperm.xlu0 %784, %v174
        %v786 = vpop.permute.xlu0 %785
        %v788 = vadd.f32 %v782, %v786
        %789 = vst [vmem:[%s160] sm:$0x1] %v788
        %s790 = sand.u32 %s93, 1
        %s791 = scalar_lea.sflag [#allocation3], %s790
        %s792 = sand.u32 %s93, 1
        %s793 = scalar_lea.vmem [#allocation2], %s792
        // Predicated region
        $region33: #{on_classify_v1.1} parent=31 // pred_check
          %p794 = pneg %p103
        $region34: #{on_classify_v1.1} parent=31 // pred_check_branch
          %796 = sbr.rel (%p794) target = $region36
        $region35: #{on_classify_v1.1} parent=31 // pred_region
          %798 = vsyncadd %s791, 0
          %s799 = scalar_lea.hbm %s3, %s17
          %s801 = sshll.u32 %s793, 4
          %s802 = int_to_ptr.vmem [resolvable:$true] %s801
          %s803 = sshll.u32 %s799, 4
          %s804 = int_to_ptr.hbm [resolvable:$true] %s803
          %806 = dma.vmem_to_hbm [thread:$0]  %s802, 16, %s804, %s791
        $region36: #{on_classify_v1.1} parent=31 // pred_fallthru
          _
      $region32: #{on_classify_v1.1} parent=5 // pred_fallthru
        _
      %p807 = scmp.le.s32.totalorder 2, %s12
      // Predicated region
      $region37: #{on_classify_v1.1} parent=5 // pred_check
        %p808 = pneg %p807
      $region38: #{on_classify_v1.1} parent=5 // pred_check_branch
        %810 = sbr.rel (%p808) target = $region40
      $region39: #{on_classify_v1.1} parent=5 // pred_region
        %s811 = ssub.s32 %s12, 2
        // Predicated region
        $region41: #{on_classify_v1.1} parent=39 // pred_check
          %p812 = pneg %p109
        $region42: #{on_classify_v1.1} parent=39 // pred_check_branch
          %814 = sbr.rel (%p812) target = $region44
        $region43: #{on_classify_v1.1} parent=39 // pred_region
          %s815 = sand.u32 %s94, 1
          %s816 = scalar_lea.sflag [#allocation3], %s815
          %s817 = sand.u32 %s94, 1
          %s818 = scalar_lea.vmem [#allocation2], %s817
          %820 = dma.done %s816, 16
        $region44: #{on_classify_v1.1} parent=39 // pred_fallthru
          _
      $region40: #{on_classify_v1.1} parent=5 // pred_fallthru
        _
    $region6: #{on_classify_v1.1} parent=1 // loop_footer
      %s16 = sadd.s32 1, %s12
    $region7: #{on_classify_v1.1} parent=1 // loop_footer_branch
      %11 = sbr.rel target = $region3
    $region8: #{on_classify_v1.1} parent=1 // loop_exit
      _
    %821 = vsyncpa [#allocation3], 1
    %s822 = scalar_lea.sflag [#allocation3], 1
    %823 = vsyncpa %s822, 1

</llo_original>
